<compile_context>
chip_gen: v7x
topology: tpu7x:2x2x1
jax: 0.10.0
libtpu: 0.0.40
codegen_flags: <defaults>
</compile_context>

<pallas_src>
import functools

import jax
import jax.numpy as jnp
from jax import lax
from jax.experimental import pallas as pl
from jax.experimental.pallas import tpu as pltpu


def _lstm_mean_kernel(g_ref, whh_ref, out_ref, h_sc, c_sc, *, seq_len, unroll):
    """One sequence chunk of the LSTM recurrence + running mean.

    g_ref   : (TS, BB, 4H) f32   precomputed, pre-scaled x@W_ih + b (gates [i|f|g|o])
    whh_ref : (H, 4H)            packed recurrent weights, columns pre-scaled
    out_ref : (BB, H) f32        sum_t h_t (scaled to mean in the last chunk)
    h_sc/c_sc : (BB, H) f32      recurrent state carried across chunks
    """
    chunk_id = pl.program_id(1)
    ts = g_ref.shape[0]
    bb, hidden = h_sc.shape

    @pl.when(chunk_id == 0)
    def _init():
        h_sc[...] = jnp.zeros_like(h_sc)
        c_sc[...] = jnp.zeros_like(c_sc)
        out_ref[...] = jnp.zeros_like(out_ref)

    whh = whh_ref[...]  # load once; reused every step

    # Hoisted per-lane post-affine for the fused-activation trick:
    # i/f/o lanes: act = 0.5*tanh(0.5*z) + 0.5 (== sigmoid(z));  g lanes: tanh(z).
    lane = lax.broadcasted_iota(jnp.int32, (bb, 4 * hidden), 1)
    is_g = jnp.logical_and(lane >= 2 * hidden, lane < 3 * hidden)
    post_scale = jnp.where(is_g, 1.0, 0.5).astype(jnp.float32)
    post_shift = jnp.where(is_g, 0.0, 0.5).astype(jnp.float32)

    def step(t, carry):
        h_prev, c_prev, acc = carry
        # Single packed recurrent matmul: (BB, H) @ (H, 4H) -> (BB, 4H) f32.
        gates = g_ref[t] + jnp.dot(h_prev.astype(whh.dtype), whh,
                                   preferred_element_type=jnp.float32)
        # ONE full-width tanh for all four gates.
        act = jnp.tanh(gates) * post_scale + post_shift
        i_g = act[:, :hidden]
        f_g = act[:, hidden:2 * hidden]
        g_g = act[:, 2 * hidden:3 * hidden]
        o_g = act[:, 3 * hidden:]
        c_new = f_g * c_prev + i_g * g_g
        h_new = o_g * jnp.tanh(c_new)
        # Padded timesteps have o_g == 0 exactly (o-lane pre-activation = -1e9
        # set in the wrapper), so h_new == 0 and the mean is untouched.
        return h_new, c_new, acc + h_new

    # State lives in registers inside the chunk; VMEM touched only at the
    # chunk boundary.
    h0 = h_sc[...]
    c0 = c_sc[...]
    acc0 = jnp.zeros_like(h0)
    h_f, c_f, acc_f = lax.fori_loop(0, ts, step, (h0, c0, acc0), unroll=unroll)

    h_sc[...] = h_f
    c_sc[...] = c_f
    out_ref[...] = out_ref[...] + acc_f

    @pl.when(chunk_id == pl.num_programs(1) - 1)
    def _finalize():
        out_ref[...] = out_ref[...] * (1.0 / seq_len)


def _round_up(n, m):
    return ((n + m - 1) // m) * m


@functools.partial(jax.jit,
                   static_argnames=("matmul_dtype", "ts", "bb", "max_ts"))
def lstm_mean_step(x, w_ih, w_hh, b_ih, b_hh, *,
                   matmul_dtype=jnp.bfloat16, ts=None, bb=None, max_ts=128):
    """Equivalent of LSTMMeanStep(net)(x) with net = single-layer
    torch.nn.LSTM(batch_first=True) returning the output sequence.

    x    : (B, S, I) f32
    w_ih : (4H, I)   f32   (PyTorch layout, gate rows [i, f, g, o])
    w_hh : (4H, H)   f32
    b_ih : (4H,)     f32
    b_hh : (4H,)     f32
    returns (B, 1, H) f32
    """
    B, S, I = x.shape
    H = w_hh.shape[1]
    G = 4 * H
    if S < 1:
        raise ValueError("sequence length must be >= 1")

    # Batch blocking: single block by default (best on single-TC v5e/v6e at
    # small B).  On v7x with B >= 16, pass bb = round_up(B, 8*2)//2 to engage
    # both TensorCores via the 'parallel' batch grid axis.
    if bb is None:
        bb = _round_up(B, 8)
    BP = _round_up(B, bb)

    # Time chunking: pick ts <= max_ts that minimizes padding.
    if ts is None:
        n_chunks = pl.cdiv(S, max_ts)
        ts = pl.cdiv(S, n_chunks)
    SP = _round_up(S, ts)
    n_chunks = SP // ts
    n_batch = BP // bb

    # Per-lane pre-scale folding sigmoid(z) = 0.5*tanh(0.5*z)+0.5 into the data.
    ones_h = jnp.ones((H,), jnp.float32)
    pre = jnp.concatenate([0.5 * ones_h, 0.5 * ones_h, ones_h, 0.5 * ones_h])  # (4H,)

    # --- Hoisted input projection: one parallel matmul, runs at full MXU
    # utilization outside the serial kernel; bias folded in once. -------------
    b = (b_ih + b_hh).astype(jnp.float32)
    gx = jnp.einsum("bsi,gi->bsg", x.astype(jnp.float32),
                    w_ih.astype(jnp.float32)) + b                  # (B, S, 4H)
    gx = gx * pre                                                  # exact (x0.5 / x1)
    gx = jnp.transpose(gx, (1, 0, 2))                              # (S, B, 4H)
    gx = jnp.pad(gx, ((0, 0), (0, BP - B), (0, 0)))
    if SP != S:
        # Padded timesteps: o-gate pre-activation -> -1e9 so sigmoid(o) == 0
        # exactly and h_t == 0, i.e. zero contribution to the mean.
        pad = jnp.zeros((SP - S, BP, G), jnp.float32).at[:, :, 3 * H:].set(-1e9)
        gx = jnp.concatenate([gx, pad], axis=0)

    # Packed recurrent weights (H, 4H), columns pre-scaled, MXU dtype.
    whh = (w_hh.T.astype(jnp.float32) * pre[None, :]).astype(matmul_dtype)

    unroll = True if ts <= 16 else 8
    kernel = functools.partial(_lstm_mean_kernel, seq_len=S, unroll=unroll)

    out = pl.pallas_call(
        kernel,
        out_shape=jax.ShapeDtypeStruct((BP, H), jnp.float32),
        grid=(n_batch, n_chunks),
        in_specs=[
            # stream the precomputed gate tensor: lane-dense (ts, bb, 4H) chunks
            pl.BlockSpec((ts, bb, G), lambda i, t: (t, i, 0)),
            pl.BlockSpec((H, G), lambda i, t: (0, 0)),
        ],
        # same output block across the (arbitrary) time axis -> resident
        # accumulator, finalized (divided by S) in the last chunk.
        out_specs=pl.BlockSpec((bb, H), lambda i, t: (i, 0)),
        scratch_shapes=[
            pltpu.VMEM((bb, H), jnp.float32),   # h (carried across chunks)
            pltpu.VMEM((bb, H), jnp.float32),   # c (carried across chunks)
        ],
        compiler_params=pltpu.CompilerParams(
            # batch blocks may shard across TensorCores; time must stay serial
            dimension_semantics=("parallel", "arbitrary"),
            vmem_limit_bytes=32 * 1024 * 1024,
        ),
    )(gx, whh)

    return out[:B, None, :]                                        # (B, 1, H)


def _reference(x, w_ih, w_hh, b_ih, b_hh):
    """Pure-JAX reference matching torch.nn.LSTM(batch_first=True) output,
    then .mean(dim=1).unsqueeze(1)."""
    B, S, I = x.shape
    H = w_hh.shape[1]
    b = b_ih + b_hh

    def cell(carry, x_t):
        h, c = carry
        gates = x_t @ w_ih.T + h @ w_hh.T + b               # (B, 4H)
        i_g = jax.nn.sigmoid(gates[:, 0:H])
        f_g = jax.nn.sigmoid(gates[:, H:2 * H])
        g_g = jnp.tanh(gates[:, 2 * H:3 * H])
        o_g = jax.nn.sigmoid(gates[:, 3 * H:4 * H])
        c_new = f_g * c + i_g * g_g
        h_new = o_g * jnp.tanh(c_new)
        return (h_new, c_new), h_new

    h0 = jnp.zeros((B, H), jnp.float32)
    c0 = jnp.zeros((B, H), jnp.float32)
    _, hs = lax.scan(cell, (h0, c0), jnp.transpose(x, (1, 0, 2)))  # (S, B, H)
    return jnp.mean(hs, axis=0)[:, None, :]                        # (B, 1, H)


if __name__ == "__main__":
    B, S, I, H = 2, 8, 16, 32

    key = jax.random.PRNGKey(0)
    kx, k1, k2, k3, k4 = jax.random.split(key, 5)

    x = jax.random.normal(kx, (B, S, I), dtype=jnp.float32)
    # Deterministic synthetic LSTM parameters (torch-style shapes).
    w_ih = 0.1 * jax.random.normal(k1, (4 * H, I), dtype=jnp.float32)
    w_hh = 0.1 * jax.random.normal(k2, (4 * H, H), dtype=jnp.float32)
    b_ih = 0.1 * jax.random.normal(k3, (4 * H,), dtype=jnp.float32)
    b_hh = 0.1 * jax.random.normal(k4, (4 * H,), dtype=jnp.float32)

    ref = jax.block_until_ready(_reference(x, w_ih, w_hh, b_ih, b_hh))

    # f32-MXU variant: tight numerical check against the pure-JAX reference.
    out_f32 = jax.block_until_ready(
        lstm_mean_step(x, w_ih, w_hh, b_ih, b_hh, matmul_dtype=jnp.float32))
    assert out_f32.shape == (B, 1, H), out_f32.shape
    assert jnp.allclose(out_f32, ref, atol=1e-4, rtol=1e-4), \
        float(jnp.max(jnp.abs(out_f32 - ref)))

    # Default perf path: bf16 MXU operands for the recurrence, f32 state/mean.
    out_bf16 = jax.block_until_ready(lstm_mean_step(x, w_ih, w_hh, b_ih, b_hh))
    assert out_bf16.shape == (B, 1, H), out_bf16.shape
    assert jnp.allclose(out_bf16, ref, atol=2e-2, rtol=2e-2), \
        float(jnp.max(jnp.abs(out_bf16 - ref)))

    # Batch padding path (B not a multiple of 8), single chunk.
    B2, S2 = 3, 5
    x2 = jax.random.normal(jax.random.PRNGKey(1), (B2, S2, I), dtype=jnp.float32)
    ref2 = jax.block_until_ready(_reference(x2, w_ih, w_hh, b_ih, b_hh))
    out2 = jax.block_until_ready(
        lstm_mean_step(x2, w_ih, w_hh, b_ih, b_hh, matmul_dtype=jnp.float32))
    assert out2.shape == (B2, 1, H), out2.shape
    assert jnp.allclose(out2, ref2, atol=1e-4, rtol=1e-4), \
        float(jnp.max(jnp.abs(out2 - ref2)))

    # Multi-chunk + time-padding path (ts forced small so SP > S).
    out3 = jax.block_until_ready(
        lstm_mean_step(x2, w_ih, w_hh, b_ih, b_hh,
                       matmul_dtype=jnp.float32, ts=2))
    assert out3.shape == (B2, 1, H), out3.shape
    assert jnp.allclose(out3, ref2, atol=1e-4, rtol=1e-4), \
        float(jnp.max(jnp.abs(out3 - ref2)))

    print("KERNEL_OK")
</pallas_src>

<mosaic_0001>
module attributes {stable_mosaic.version = 11 : i64} {
  func.func @_lstm_mean_kernel(%arg0: i32, %arg1: i32, %arg2: memref<8x8x128xf32, #tpu.memory_space<vmem>>, %arg3: memref<32x128xf32, #tpu.memory_space<vmem>>, %arg4: memref<8x32xf32, #tpu.memory_space<vmem>>, %arg5: memref<8x32xf32, #tpu.memory_space<vmem>>, %arg6: memref<8x32xf32, #tpu.memory_space<vmem>>) attributes {dimension_semantics = [#tpu.dimension_semantics<parallel>, #tpu.dimension_semantics<arbitrary>], iteration_bounds = array<i64: 1, 1>, scalar_prefetch = 0 : i64, scratch_operands = 2 : i64, tpu.core_type = #tpu.core_type<tc>, window_params = [{transform_indices = @transform_0, window_bounds = array<i64: 8, 8, 128>}, {pipeline_mode = #tpu.pipeline_mode<synchronous>, transform_indices = @transform_1, window_bounds = array<i64: 32, 128>}, {transform_indices = @transform_2, window_bounds = array<i64: 8, 32>}]} {
    %c0_i32 = arith.constant 0 : i32
    %0 = arith.cmpi eq, %arg1, %c0_i32 : i32
    %1 = arith.extui %0 : i1 to i32
    %c0_i32_0 = arith.constant 0 : i32
    %2 = arith.cmpi ne, %1, %c0_i32_0 : i32
    scf.if %2 {
      %cst_45 = arith.constant 0.000000e+00 : f32
      %171 = vector.broadcast %cst_45 : f32 to vector<8x32xf32>
      %c0_46 = arith.constant 0 : index
      %c0_47 = arith.constant 0 : index
      %172 = vector.load %arg5[%c0_46, %c0_47] : memref<8x32xf32, #tpu.memory_space<vmem>>, vector<8x32xf32>
      tpu.vector_store %arg5[%c0_46, %c0_47], %171 {strides = array<i32>} : memref<8x32xf32, #tpu.memory_space<vmem>>, vector<8x32xf32>,
      %cst_48 = arith.constant 0.000000e+00 : f32
      %173 = vector.broadcast %cst_48 : f32 to vector<8x32xf32>
      %c0_49 = arith.constant 0 : index
      %c0_50 = arith.constant 0 : index
      %174 = vector.load %arg6[%c0_49, %c0_50] : memref<8x32xf32, #tpu.memory_space<vmem>>, vector<8x32xf32>
      tpu.vector_store %arg6[%c0_49, %c0_50], %173 {strides = array<i32>} : memref<8x32xf32, #tpu.memory_space<vmem>>, vector<8x32xf32>,
      %cst_51 = arith.constant 0.000000e+00 : f32
      %175 = vector.broadcast %cst_51 : f32 to vector<8x32xf32>
      %c0_52 = arith.constant 0 : index
      %c0_53 = arith.constant 0 : index
      %176 = vector.load %arg4[%c0_52, %c0_53] : memref<8x32xf32, #tpu.memory_space<vmem>>, vector<8x32xf32>
      tpu.vector_store %arg4[%c0_52, %c0_53], %175 {strides = array<i32>} : memref<8x32xf32, #tpu.memory_space<vmem>>, vector<8x32xf32>,
    } else {
    }
    %c0 = arith.constant 0 : index
    %c0_1 = arith.constant 0 : index
    %3 = vector.load %arg3[%c0, %c0_1] : memref<32x128xf32, #tpu.memory_space<vmem>>, vector<32x128xf32>
    %4 = tpu.iota {dimensions = array<i32: 1>} : vector<8x128xi32>
    %c64_i32 = arith.constant 64 : i32
    %5 = vector.broadcast %c64_i32 : i32 to vector<8x128xi32>
    %6 = arith.cmpi sge, %4, %5 : vector<8x128xi32>
    %c96_i32 = arith.constant 96 : i32
    %7 = vector.broadcast %c96_i32 : i32 to vector<8x128xi32>
    %8 = arith.cmpi slt, %4, %7 : vector<8x128xi32>
    %9 = arith.andi %6, %8 : vector<8x128xi1>
    %cst = arith.constant 1.000000e+00 : f32
    %cst_2 = arith.constant 5.000000e-01 : f32
    %10 = vector.broadcast %cst : f32 to vector<8x128xf32>
    %11 = vector.broadcast %cst_2 : f32 to vector<8x128xf32>
    %12 = arith.select %9, %10, %11 : vector<8x128xi1>, vector<8x128xf32>
    %cst_3 = arith.constant 0.000000e+00 : f32
    %cst_4 = arith.constant 5.000000e-01 : f32
    %13 = vector.broadcast %cst_3 : f32 to vector<8x128xf32>
    %14 = vector.broadcast %cst_4 : f32 to vector<8x128xf32>
    %15 = arith.select %9, %13, %14 : vector<8x128xi1>, vector<8x128xf32>
    %c0_5 = arith.constant 0 : index
    %c0_6 = arith.constant 0 : index
    %16 = vector.load %arg5[%c0_5, %c0_6] : memref<8x32xf32, #tpu.memory_space<vmem>>, vector<8x32xf32>
    %c0_7 = arith.constant 0 : index
    %c0_8 = arith.constant 0 : index
    %17 = vector.load %arg6[%c0_7, %c0_8] : memref<8x32xf32, #tpu.memory_space<vmem>>, vector<8x32xf32>
    %cst_9 = arith.constant 0.000000e+00 : f32
    %18 = vector.broadcast %cst_9 : f32 to vector<8x32xf32>
    %c0_i32_10 = arith.constant 0 : i32
    %19 = arith.index_cast %c0_i32_10 : i32 to index
    %c0_11 = arith.constant 0 : index
    %c0_12 = arith.constant 0 : index
    %20 = vector.load %arg2[%19, %c0_11, %c0_12] : memref<8x8x128xf32, #tpu.memory_space<vmem>>, vector<1x8x128xf32>
    %21 = vector.shape_cast %20 : vector<1x8x128xf32> to vector<8x128xf32>
    %cst_13 = arith.constant dense<0.000000e+00> : vector<8x128xf32>
    %22 = tpu.matmul %16, %3, %cst_13 {dimension_numbers = #tpu.dot_dimension_numbers<[1], [0], [0], [1], [0, 0, 1, 1], [], []>} : vector<8x32xf32>, vector<32x128xf32>, vector<8x128xf32> -> vector<8x128xf32>
    %23 = arith.addf %21, %22 : vector<8x128xf32>
    %24 = math.tanh %23 : vector<8x128xf32>
    %25 = arith.mulf %24, %12 : vector<8x128xf32>
    %26 = arith.addf %25, %15 : vector<8x128xf32>
    %27 = vector.extract_strided_slice %26 {offsets = [0, 0], sizes = [8, 32], strides = [1, 1]} : vector<8x128xf32> to vector<8x32xf32>
    %28 = vector.extract_strided_slice %26 {offsets = [0, 32], sizes = [8, 32], strides = [1, 1]} : vector<8x128xf32> to vector<8x32xf32>
    %29 = vector.extract_strided_slice %26 {offsets = [0, 64], sizes = [8, 32], strides = [1, 1]} : vector<8x128xf32> to vector<8x32xf32>
    %30 = vector.extract_strided_slice %26 {offsets = [0, 96], sizes = [8, 32], strides = [1, 1]} : vector<8x128xf32> to vector<8x32xf32>
    %31 = arith.mulf %28, %17 : vector<8x32xf32>
    %32 = arith.mulf %27, %29 : vector<8x32xf32>
    %33 = arith.addf %31, %32 : vector<8x32xf32>
    %34 = math.tanh %33 : vector<8x32xf32>
    %35 = arith.mulf %30, %34 : vector<8x32xf32>
    %36 = arith.addf %18, %35 : vector<8x32xf32>
    %c1_i32 = arith.constant 1 : i32
    %37 = arith.index_cast %c1_i32 : i32 to index
    %c0_14 = arith.constant 0 : index
    %c0_15 = arith.constant 0 : index
    %38 = vector.load %arg2[%37, %c0_14, %c0_15] : memref<8x8x128xf32, #tpu.memory_space<vmem>>, vector<1x8x128xf32>
    %39 = vector.shape_cast %38 : vector<1x8x128xf32> to vector<8x128xf32>
    %cst_16 = arith.constant dense<0.000000e+00> : vector<8x128xf32>
    %40 = tpu.matmul %35, %3, %cst_16 {dimension_numbers = #tpu.dot_dimension_numbers<[1], [0], [0], [1], [0, 0, 1, 1], [], []>} : vector<8x32xf32>, vector<32x128xf32>, vector<8x128xf32> -> vector<8x128xf32>
    %41 = arith.addf %39, %40 : vector<8x128xf32>
    %42 = math.tanh %41 : vector<8x128xf32>
    %43 = arith.mulf %42, %12 : vector<8x128xf32>
    %44 = arith.addf %43, %15 : vector<8x128xf32>
    %45 = vector.extract_strided_slice %44 {offsets = [0, 0], sizes = [8, 32], strides = [1, 1]} : vector<8x128xf32> to vector<8x32xf32>
    %46 = vector.extract_strided_slice %44 {offsets = [0, 32], sizes = [8, 32], strides = [1, 1]} : vector<8x128xf32> to vector<8x32xf32>
    %47 = vector.extract_strided_slice %44 {offsets = [0, 64], sizes = [8, 32], strides = [1, 1]} : vector<8x128xf32> to vector<8x32xf32>
    %48 = vector.extract_strided_slice %44 {offsets = [0, 96], sizes = [8, 32], strides = [1, 1]} : vector<8x128xf32> to vector<8x32xf32>
    %49 = arith.mulf %46, %33 : vector<8x32xf32>
    %50 = arith.mulf %45, %47 : vector<8x32xf32>
    %51 = arith.addf %49, %50 : vector<8x32xf32>
    %52 = math.tanh %51 : vector<8x32xf32>
    %53 = arith.mulf %48, %52 : vector<8x32xf32>
    %54 = arith.addf %36, %53 : vector<8x32xf32>
    %c2_i32 = arith.constant 2 : i32
    %55 = arith.index_cast %c2_i32 : i32 to index
    %c0_17 = arith.constant 0 : index
    %c0_18 = arith.constant 0 : index
    %56 = vector.load %arg2[%55, %c0_17, %c0_18] : memref<8x8x128xf32, #tpu.memory_space<vmem>>, vector<1x8x128xf32>
    %57 = vector.shape_cast %56 : vector<1x8x128xf32> to vector<8x128xf32>
    %cst_19 = arith.constant dense<0.000000e+00> : vector<8x128xf32>
    %58 = tpu.matmul %53, %3, %cst_19 {dimension_numbers = #tpu.dot_dimension_numbers<[1], [0], [0], [1], [0, 0, 1, 1], [], []>} : vector<8x32xf32>, vector<32x128xf32>, vector<8x128xf32> -> vector<8x128xf32>
    %59 = arith.addf %57, %58 : vector<8x128xf32>
    %60 = math.tanh %59 : vector<8x128xf32>
    %61 = arith.mulf %60, %12 : vector<8x128xf32>
    %62 = arith.addf %61, %15 : vector<8x128xf32>
    %63 = vector.extract_strided_slice %62 {offsets = [0, 0], sizes = [8, 32], strides = [1, 1]} : vector<8x128xf32> to vector<8x32xf32>
    %64 = vector.extract_strided_slice %62 {offsets = [0, 32], sizes = [8, 32], strides = [1, 1]} : vector<8x128xf32> to vector<8x32xf32>
    %65 = vector.extract_strided_slice %62 {offsets = [0, 64], sizes = [8, 32], strides = [1, 1]} : vector<8x128xf32> to vector<8x32xf32>
    %66 = vector.extract_strided_slice %62 {offsets = [0, 96], sizes = [8, 32], strides = [1, 1]} : vector<8x128xf32> to vector<8x32xf32>
    %67 = arith.mulf %64, %51 : vector<8x32xf32>
    %68 = arith.mulf %63, %65 : vector<8x32xf32>
    %69 = arith.addf %67, %68 : vector<8x32xf32>
    %70 = math.tanh %69 : vector<8x32xf32>
    %71 = arith.mulf %66, %70 : vector<8x32xf32>
    %72 = arith.addf %54, %71 : vector<8x32xf32>
    %c3_i32 = arith.constant 3 : i32
    %73 = arith.index_cast %c3_i32 : i32 to index
    %c0_20 = arith.constant 0 : index
    %c0_21 = arith.constant 0 : index
    %74 = vector.load %arg2[%73, %c0_20, %c0_21] : memref<8x8x128xf32, #tpu.memory_space<vmem>>, vector<1x8x128xf32>
    %75 = vector.shape_cast %74 : vector<1x8x128xf32> to vector<8x128xf32>
    %cst_22 = arith.constant dense<0.000000e+00> : vector<8x128xf32>
    %76 = tpu.matmul %71, %3, %cst_22 {dimension_numbers = #tpu.dot_dimension_numbers<[1], [0], [0], [1], [0, 0, 1, 1], [], []>} : vector<8x32xf32>, vector<32x128xf32>, vector<8x128xf32> -> vector<8x128xf32>
    %77 = arith.addf %75, %76 : vector<8x128xf32>
    %78 = math.tanh %77 : vector<8x128xf32>
    %79 = arith.mulf %78, %12 : vector<8x128xf32>
    %80 = arith.addf %79, %15 : vector<8x128xf32>
    %81 = vector.extract_strided_slice %80 {offsets = [0, 0], sizes = [8, 32], strides = [1, 1]} : vector<8x128xf32> to vector<8x32xf32>
    %82 = vector.extract_strided_slice %80 {offsets = [0, 32], sizes = [8, 32], strides = [1, 1]} : vector<8x128xf32> to vector<8x32xf32>
    %83 = vector.extract_strided_slice %80 {offsets = [0, 64], sizes = [8, 32], strides = [1, 1]} : vector<8x128xf32> to vector<8x32xf32>
    %84 = vector.extract_strided_slice %80 {offsets = [0, 96], sizes = [8, 32], strides = [1, 1]} : vector<8x128xf32> to vector<8x32xf32>
    %85 = arith.mulf %82, %69 : vector<8x32xf32>
    %86 = arith.mulf %81, %83 : vector<8x32xf32>
    %87 = arith.addf %85, %86 : vector<8x32xf32>
    %88 = math.tanh %87 : vector<8x32xf32>
    %89 = arith.mulf %84, %88 : vector<8x32xf32>
    %90 = arith.addf %72, %89 : vector<8x32xf32>
    %c4_i32 = arith.constant 4 : i32
    %91 = arith.index_cast %c4_i32 : i32 to index
    %c0_23 = arith.constant 0 : index
    %c0_24 = arith.constant 0 : index
    %92 = vector.load %arg2[%91, %c0_23, %c0_24] : memref<8x8x128xf32, #tpu.memory_space<vmem>>, vector<1x8x128xf32>
    %93 = vector.shape_cast %92 : vector<1x8x128xf32> to vector<8x128xf32>
    %cst_25 = arith.constant dense<0.000000e+00> : vector<8x128xf32>
    %94 = tpu.matmul %89, %3, %cst_25 {dimension_numbers = #tpu.dot_dimension_numbers<[1], [0], [0], [1], [0, 0, 1, 1], [], []>} : vector<8x32xf32>, vector<32x128xf32>, vector<8x128xf32> -> vector<8x128xf32>
    %95 = arith.addf %93, %94 : vector<8x128xf32>
    %96 = math.tanh %95 : vector<8x128xf32>
    %97 = arith.mulf %96, %12 : vector<8x128xf32>
    %98 = arith.addf %97, %15 : vector<8x128xf32>
    %99 = vector.extract_strided_slice %98 {offsets = [0, 0], sizes = [8, 32], strides = [1, 1]} : vector<8x128xf32> to vector<8x32xf32>
    %100 = vector.extract_strided_slice %98 {offsets = [0, 32], sizes = [8, 32], strides = [1, 1]} : vector<8x128xf32> to vector<8x32xf32>
    %101 = vector.extract_strided_slice %98 {offsets = [0, 64], sizes = [8, 32], strides = [1, 1]} : vector<8x128xf32> to vector<8x32xf32>
    %102 = vector.extract_strided_slice %98 {offsets = [0, 96], sizes = [8, 32], strides = [1, 1]} : vector<8x128xf32> to vector<8x32xf32>
    %103 = arith.mulf %100, %87 : vector<8x32xf32>
    %104 = arith.mulf %99, %101 : vector<8x32xf32>
    %105 = arith.addf %103, %104 : vector<8x32xf32>
    %106 = math.tanh %105 : vector<8x32xf32>
    %107 = arith.mulf %102, %106 : vector<8x32xf32>
    %108 = arith.addf %90, %107 : vector<8x32xf32>
    %c5_i32 = arith.constant 5 : i32
    %109 = arith.index_cast %c5_i32 : i32 to index
    %c0_26 = arith.constant 0 : index
    %c0_27 = arith.constant 0 : index
    %110 = vector.load %arg2[%109, %c0_26, %c0_27] : memref<8x8x128xf32, #tpu.memory_space<vmem>>, vector<1x8x128xf32>
    %111 = vector.shape_cast %110 : vector<1x8x128xf32> to vector<8x128xf32>
    %cst_28 = arith.constant dense<0.000000e+00> : vector<8x128xf32>
    %112 = tpu.matmul %107, %3, %cst_28 {dimension_numbers = #tpu.dot_dimension_numbers<[1], [0], [0], [1], [0, 0, 1, 1], [], []>} : vector<8x32xf32>, vector<32x128xf32>, vector<8x128xf32> -> vector<8x128xf32>
    %113 = arith.addf %111, %112 : vector<8x128xf32>
    %114 = math.tanh %113 : vector<8x128xf32>
    %115 = arith.mulf %114, %12 : vector<8x128xf32>
    %116 = arith.addf %115, %15 : vector<8x128xf32>
    %117 = vector.extract_strided_slice %116 {offsets = [0, 0], sizes = [8, 32], strides = [1, 1]} : vector<8x128xf32> to vector<8x32xf32>
    %118 = vector.extract_strided_slice %116 {offsets = [0, 32], sizes = [8, 32], strides = [1, 1]} : vector<8x128xf32> to vector<8x32xf32>
    %119 = vector.extract_strided_slice %116 {offsets = [0, 64], sizes = [8, 32], strides = [1, 1]} : vector<8x128xf32> to vector<8x32xf32>
    %120 = vector.extract_strided_slice %116 {offsets = [0, 96], sizes = [8, 32], strides = [1, 1]} : vector<8x128xf32> to vector<8x32xf32>
    %121 = arith.mulf %118, %105 : vector<8x32xf32>
    %122 = arith.mulf %117, %119 : vector<8x32xf32>
    %123 = arith.addf %121, %122 : vector<8x32xf32>
    %124 = math.tanh %123 : vector<8x32xf32>
    %125 = arith.mulf %120, %124 : vector<8x32xf32>
    %126 = arith.addf %108, %125 : vector<8x32xf32>
    %c6_i32 = arith.constant 6 : i32
    %127 = arith.index_cast %c6_i32 : i32 to index
    %c0_29 = arith.constant 0 : index
    %c0_30 = arith.constant 0 : index
    %128 = vector.load %arg2[%127, %c0_29, %c0_30] : memref<8x8x128xf32, #tpu.memory_space<vmem>>, vector<1x8x128xf32>
    %129 = vector.shape_cast %128 : vector<1x8x128xf32> to vector<8x128xf32>
    %cst_31 = arith.constant dense<0.000000e+00> : vector<8x128xf32>
    %130 = tpu.matmul %125, %3, %cst_31 {dimension_numbers = #tpu.dot_dimension_numbers<[1], [0], [0], [1], [0, 0, 1, 1], [], []>} : vector<8x32xf32>, vector<32x128xf32>, vector<8x128xf32> -> vector<8x128xf32>
    %131 = arith.addf %129, %130 : vector<8x128xf32>
    %132 = math.tanh %131 : vector<8x128xf32>
    %133 = arith.mulf %132, %12 : vector<8x128xf32>
    %134 = arith.addf %133, %15 : vector<8x128xf32>
    %135 = vector.extract_strided_slice %134 {offsets = [0, 0], sizes = [8, 32], strides = [1, 1]} : vector<8x128xf32> to vector<8x32xf32>
    %136 = vector.extract_strided_slice %134 {offsets = [0, 32], sizes = [8, 32], strides = [1, 1]} : vector<8x128xf32> to vector<8x32xf32>
    %137 = vector.extract_strided_slice %134 {offsets = [0, 64], sizes = [8, 32], strides = [1, 1]} : vector<8x128xf32> to vector<8x32xf32>
    %138 = vector.extract_strided_slice %134 {offsets = [0, 96], sizes = [8, 32], strides = [1, 1]} : vector<8x128xf32> to vector<8x32xf32>
    %139 = arith.mulf %136, %123 : vector<8x32xf32>
    %140 = arith.mulf %135, %137 : vector<8x32xf32>
    %141 = arith.addf %139, %140 : vector<8x32xf32>
    %142 = math.tanh %141 : vector<8x32xf32>
    %143 = arith.mulf %138, %142 : vector<8x32xf32>
    %144 = arith.addf %126, %143 : vector<8x32xf32>
    %c7_i32 = arith.constant 7 : i32
    %145 = arith.index_cast %c7_i32 : i32 to index
    %c0_32 = arith.constant 0 : index
    %c0_33 = arith.constant 0 : index
    %146 = vector.load %arg2[%145, %c0_32, %c0_33] : memref<8x8x128xf32, #tpu.memory_space<vmem>>, vector<1x8x128xf32>
    %147 = vector.shape_cast %146 : vector<1x8x128xf32> to vector<8x128xf32>
    %cst_34 = arith.constant dense<0.000000e+00> : vector<8x128xf32>
    %148 = tpu.matmul %143, %3, %cst_34 {dimension_numbers = #tpu.dot_dimension_numbers<[1], [0], [0], [1], [0, 0, 1, 1], [], []>} : vector<8x32xf32>, vector<32x128xf32>, vector<8x128xf32> -> vector<8x128xf32>
    %149 = arith.addf %147, %148 : vector<8x128xf32>
    %150 = math.tanh %149 : vector<8x128xf32>
    %151 = arith.mulf %150, %12 : vector<8x128xf32>
    %152 = arith.addf %151, %15 : vector<8x128xf32>
    %153 = vector.extract_strided_slice %152 {offsets = [0, 0], sizes = [8, 32], strides = [1, 1]} : vector<8x128xf32> to vector<8x32xf32>
    %154 = vector.extract_strided_slice %152 {offsets = [0, 32], sizes = [8, 32], strides = [1, 1]} : vector<8x128xf32> to vector<8x32xf32>
    %155 = vector.extract_strided_slice %152 {offsets = [0, 64], sizes = [8, 32], strides = [1, 1]} : vector<8x128xf32> to vector<8x32xf32>
    %156 = vector.extract_strided_slice %152 {offsets = [0, 96], sizes = [8, 32], strides = [1, 1]} : vector<8x128xf32> to vector<8x32xf32>
    %157 = arith.mulf %154, %141 : vector<8x32xf32>
    %158 = arith.mulf %153, %155 : vector<8x32xf32>
    %159 = arith.addf %157, %158 : vector<8x32xf32>
    %160 = math.tanh %159 : vector<8x32xf32>
    %161 = arith.mulf %156, %160 : vector<8x32xf32>
    %162 = arith.addf %144, %161 : vector<8x32xf32>
    %c8_i32 = arith.constant 8 : i32
    %c0_35 = arith.constant 0 : index
    %c0_36 = arith.constant 0 : index
    %163 = vector.load %arg5[%c0_35, %c0_36] : memref<8x32xf32, #tpu.memory_space<vmem>>, vector<8x32xf32>
    tpu.vector_store %arg5[%c0_35, %c0_36], %161 {strides = array<i32>} : memref<8x32xf32, #tpu.memory_space<vmem>>, vector<8x32xf32>,
    %c0_37 = arith.constant 0 : index
    %c0_38 = arith.constant 0 : index
    %164 = vector.load %arg6[%c0_37, %c0_38] : memref<8x32xf32, #tpu.memory_space<vmem>>, vector<8x32xf32>
    tpu.vector_store %arg6[%c0_37, %c0_38], %159 {strides = array<i32>} : memref<8x32xf32, #tpu.memory_space<vmem>>, vector<8x32xf32>,
    %c0_39 = arith.constant 0 : index
    %c0_40 = arith.constant 0 : index
    %165 = vector.load %arg4[%c0_39, %c0_40] : memref<8x32xf32, #tpu.memory_space<vmem>>, vector<8x32xf32>
    %166 = arith.addf %165, %162 : vector<8x32xf32>
    %c0_41 = arith.constant 0 : index
    %c0_42 = arith.constant 0 : index
    %167 = vector.load %arg4[%c0_41, %c0_42] : memref<8x32xf32, #tpu.memory_space<vmem>>, vector<8x32xf32>
    tpu.vector_store %arg4[%c0_41, %c0_42], %166 {strides = array<i32>} : memref<8x32xf32, #tpu.memory_space<vmem>>, vector<8x32xf32>,
    %c0_i32_43 = arith.constant 0 : i32
    %168 = arith.cmpi eq, %arg1, %c0_i32_43 : i32
    %169 = arith.extui %168 : i1 to i32
    %c0_i32_44 = arith.constant 0 : i32
    %170 = arith.cmpi ne, %169, %c0_i32_44 : i32
    scf.if %170 {
      %c0_45 = arith.constant 0 : index
      %c0_46 = arith.constant 0 : index
      %171 = vector.load %arg4[%c0_45, %c0_46] : memref<8x32xf32, #tpu.memory_space<vmem>>, vector<8x32xf32>
      %cst_47 = arith.constant 1.250000e-01 : f32
      %172 = vector.broadcast %cst_47 : f32 to vector<8x32xf32>
      %173 = arith.mulf %171, %172 : vector<8x32xf32>
      %c0_48 = arith.constant 0 : index
      %c0_49 = arith.constant 0 : index
      %174 = vector.load %arg4[%c0_48, %c0_49] : memref<8x32xf32, #tpu.memory_space<vmem>>, vector<8x32xf32>
      tpu.vector_store %arg4[%c0_48, %c0_49], %173 {strides = array<i32>} : memref<8x32xf32, #tpu.memory_space<vmem>>, vector<8x32xf32>,
    } else {
    }
    return
  }
  func.func @transform_0(%arg0: i32, %arg1: i32) -> (i32, i32, i32) {
    %c0_i32 = arith.constant 0 : i32
    %c0_i32_0 = arith.constant 0 : i32
    return %arg1, %arg0, %c0_i32 : i32, i32, i32
  }
  func.func @transform_1(%arg0: i32, %arg1: i32) -> (i32, i32) {
    %c0_i32 = arith.constant 0 : i32
    %c0_i32_0 = arith.constant 0 : i32
    %c0_i32_1 = arith.constant 0 : i32
    return %c0_i32, %c0_i32_0 : i32, i32
  }
  func.func @transform_2(%arg0: i32, %arg1: i32) -> (i32, i32) {
    %c0_i32 = arith.constant 0 : i32
    %c0_i32_0 = arith.constant 0 : i32
    return %arg0, %c0_i32 : i32, i32
  }
}

</mosaic_0001>

<llo_original>
// kernel: lstm_mean_step.1
$region0: #{lstm_mean_step.1}
  #allocation0 [shape = 'u32[]', space=smem, size = 0x4, offset = 0x4, fixed_abs, tag = 'smem constant byte address 0x4 - core index']
  #allocation1 [shape = 'u32[144,128]{1,0:T(1,128)}', space=vmem, size = 0x12000, scoped, tag = 'internal scratch']
  #allocation2 [shape = 'f32[8,32]{1,0:T(8,128)}', space=vmem, size = 0x1000, scoped, tag = 'scratch operand']
  #allocation3 [shape = 'f32[8,32]{1,0:T(8,128)}', space=vmem, size = 0x1000, scoped, tag = 'scratch operand']
  %s0 = inlined_call_operand.vmem [shape: f32[8,8,128], index: 0, kind: input, shape index: {}]
  %s1 = inlined_call_operand.vmem [shape: f32[32,128], index: 1, kind: input, shape index: {}]
  %s2 = inlined_call_operand.vmem [shape: f32[8,32], index: 2, kind: output, shape index: {}]
  %s3 = sld [smem:[#allocation0]]
  $region26: #{lstm_mean_step.1} parent=0
    _
  %s5 = ssub.s32 1, %s3
  %s6 = scalar_select 0, %s5, %s3
  // Predicated region
  $region2: #{lstm_mean_step.1} parent=0 // pred_check
    _
  $region3: #{lstm_mean_step.1} parent=0 // pred_check_branch
    %8 = sbr.rel (0) target = $region5
  $region4: #{lstm_mean_step.1} parent=0 // pred_region
    _
  $region5: #{lstm_mean_step.1} parent=0 // pred_fallthru
    _
  // Predicated region
  $region6: #{lstm_mean_step.1} parent=0 // pred_check
    _
  $region7: #{lstm_mean_step.1} parent=0 // pred_check_branch
    %10 = sbr.rel (0) target = $region9
  $region8: #{lstm_mean_step.1} parent=0 // pred_region
    _
  $region9: #{lstm_mean_step.1} parent=0 // pred_fallthru
    _
  %p11 = scmp.eq.s32.totalorder 0, 0
  // Predicated region
  $region10: #{lstm_mean_step.1} parent=0 // pred_check
    %p12 = pneg %p11
  $region11: #{lstm_mean_step.1} parent=0 // pred_check_branch
    %14 = sbr.rel (%p12) target = $region13
  $region12: #{lstm_mean_step.1} parent=0 // pred_region
    %vm15 = vcmask 261120
    %16 = vst.msk [vmem:[#allocation2] sm:$0xff] %vm15, 0.0
    %17 = vst.msk [vmem:[#allocation3] sm:$0xff] %vm15, 0.0
    %18 = vst.msk [vmem:[%s2] sm:$0xff] %vm15, 0.0
  $region13: #{lstm_mean_step.1} parent=0 // pred_fallthru
    _
  %v19 = vld [vmem:[%s1] sm:$0xff]
  %v20 = vld [vmem:[%s1 + $0x8] sm:$0xff]
  %v21 = vld [vmem:[%s1 + $0x10] sm:$0xff]
  %v22 = vld [vmem:[%s1 + $0x18] sm:$0xff]
  %v23 = vlaneseq
  %v24 = vand.u32 %v23, 127
  %vm25 = vcmp.ge.s32.totalorder %v24, 64
  %vm26 = vcmp.lt.s32.totalorder %v24, 96
  %vm27 = vmand %vm25, %vm26
  %v28 = vsel %vm27, 1.0, 0.5
  %v29 = vsel %vm27, 0.0, 0.5
  %v30 = vld [vmem:[#allocation2] sm:$0xff]
  %v31 = vld [vmem:[#allocation3] sm:$0xff]
  %v32 = vld [vmem:[%s0] sm:$0xff]
  %vm33 = vcmask 261120
  %v35 = vsel %vm33, %v30, 0
  %37 = vmatprep.subr.mxu0 0.0
  %38 = vmatpush1.msra.mxu0 %v19
  %39 = vmatprep.subr.mxu0 0.0
  %40 = vmatpush1.msra.mxu0 %v20
  %41 = vmatprep.subr.mxu0 0.0
  %42 = vmatpush1.msra.mxu0 %v21
  %43 = vmatprep.subr.mxu0 0.0
  %44 = vmatpush1.msra.mxu0 %v22
  %45 = vmatprep.subr.mxu0 0.0
  %46 = vmatpush1.msra.mxu0 0.0
  %47 = vmatprep.subr.mxu0 0.0
  %48 = vmatpush1.msra.mxu0 0.0
  %49 = vmatprep.subr.mxu0 0.0
  %50 = vmatpush1.msra.mxu0 0.0
  %51 = vmatprep.subr.mxu0 0.0
  %52 = vmatpush1.msra.mxu0 0.0
  %53 = vmatprep.subr.mxu0 0.0
  %54 = vmatpush1.msra.mxu0 0.0
  %55 = vmatprep.subr.mxu0 0.0
  %56 = vmatpush1.msra.mxu0 0.0
  %57 = vmatprep.subr.mxu0 0.0
  %58 = vmatpush1.msra.mxu0 0.0
  %59 = vmatprep.subr.mxu0 0.0
  %60 = vmatpush1.msra.mxu0 0.0
  %61 = vmatprep.subr.mxu0 0.0
  %62 = vmatpush1.msra.mxu0 0.0
  %63 = vmatprep.subr.mxu0 0.0
  %64 = vmatpush1.msra.mxu0 0.0
  %65 = vmatprep.subr.mxu0 0.0
  %66 = vmatpush1.msra.mxu0 0.0
  %67 = vmatprep.subr.mxu0 0.0
  %68 = vmatpush1.msra.mxu0 0.0
  %69 = vmatprep.subr.mxu0 0.0
  %70 = vmatpush1.msra.mxu0 0.0
  %71 = vmatprep.subr.mxu0 0.0
  %72 = vmatpush1.msra.mxu0 0.0
  %73 = vmatprep.subr.mxu0 0.0
  %74 = vmatpush1.msra.mxu0 0.0
  %75 = vmatprep.subr.mxu0 0.0
  %76 = vmatpush1.msra.mxu0 0.0
  %77 = vmatprep.subr.mxu0 0.0
  %78 = vmatpush1.msra.mxu0 0.0
  %79 = vmatprep.subr.mxu0 0.0
  %80 = vmatpush1.msra.mxu0 0.0
  %81 = vmatprep.subr.mxu0 0.0
  %82 = vmatpush1.msra.mxu0 0.0
  %83 = vmatprep.subr.mxu0 0.0
  %84 = vmatpush1.msra.mxu0 0.0
  %85 = vmatprep.subr.mxu0 0.0
  %86 = vmatpush1.msra.mxu0 0.0
  %87 = vmatprep.subr.mxu0 0.0
  %88 = vmatpush1.msra.mxu0 0.0
  %89 = vmatprep.subr.mxu0 0.0
  %90 = vmatpush1.msra.mxu0 0.0
  %91 = vmatprep.subr.mxu0 0.0
  %92 = vmatpush1.msra.mxu0 0.0
  %93 = vmatprep.subr.mxu0 0.0
  %94 = vmatpush1.msra.mxu0 0.0
  %95 = vmatprep.subr.mxu0 0.0
  %96 = vmatpush1.msra.mxu0 0.0
  %97 = vmatprep.subr.mxu0 0.0
  %98 = vmatpush1.msra.mxu0 0.0
  %99 = vmatprep.subr.mxu0 0.0
  %100 = vmatpush1.msra.mxu0 0.0
  %101 = vmatprep.mubr.f32.mxu0 0.0
  %102 = vmatmul.mubr.f32.gmra.mrb[0].mxu0 %v35
  %v103 = vpop.f32.mrb[0].mxu0
  %v104 = vadd.f32 0.0, %v103
  %v105 = vpop.f32.mrb[0].mxu0
  %106 = vdwg.mxu0
  %v107 = vadd.f32 %v32, %v104
  %v108 = vtanh.pop %v107
  %v109 = vmul.f32 %v108, %v28
  %v110 = vadd.f32 %v109, %v29
  %112 = vrot.lane.b32.xlu0 %v31, 32
  %v113 = vpop.permute.xlu0 %112
  %v115 = vmul.f32 %v110, %v113
  %117 = vrot.lane.b32.xlu0 %v110, 64
  %v118 = vpop.permute.xlu0 %117
  %v120 = vmul.f32 %v110, %v118
  %122 = vrot.lane.b32.xlu0 %v120, 32
  %v123 = vpop.permute.xlu0 %122
  %v125 = vadd.f32 %v115, %v123
  %v126 = vtanh.pop %v125
  %128 = vrot.lane.b32.xlu0 %v126, 64
  %v129 = vpop.permute.xlu0 %128
  %v131 = vmul.f32 %v110, %v129
  %v132 = vadd.f32 %v131, 0.0
  %s133 = scalar_lea.vmem %s0, 8
  %v134 = vld [vmem:[%s133] sm:$0xff]
  %136 = vrot.lane.b32.xlu0 %v131, 32
  %v137 = vpop.permute.xlu0 %136
  %v138 = vsel %vm33, %v137, 0
  %140 = vmatprep.subr.mxu0 0.0
  %141 = vmatpush1.msra.mxu0 %v19
  %142 = vmatprep.subr.mxu0 0.0
  %143 = vmatpush1.msra.mxu0 %v20
  %144 = vmatprep.subr.mxu0 0.0
  %145 = vmatpush1.msra.mxu0 %v21
  %146 = vmatprep.subr.mxu0 0.0
  %147 = vmatpush1.msra.mxu0 %v22
  %148 = vmatprep.subr.mxu0 0.0
  %149 = vmatpush1.msra.mxu0 0.0
  %150 = vmatprep.subr.mxu0 0.0
  %151 = vmatpush1.msra.mxu0 0.0
  %152 = vmatprep.subr.mxu0 0.0
  %153 = vmatpush1.msra.mxu0 0.0
  %154 = vmatprep.subr.mxu0 0.0
  %155 = vmatpush1.msra.mxu0 0.0
  %156 = vmatprep.subr.mxu0 0.0
  %157 = vmatpush1.msra.mxu0 0.0
  %158 = vmatprep.subr.mxu0 0.0
  %159 = vmatpush1.msra.mxu0 0.0
  %160 = vmatprep.subr.mxu0 0.0
  %161 = vmatpush1.msra.mxu0 0.0
  %162 = vmatprep.subr.mxu0 0.0
  %163 = vmatpush1.msra.mxu0 0.0
  %164 = vmatprep.subr.mxu0 0.0
  %165 = vmatpush1.msra.mxu0 0.0
  %166 = vmatprep.subr.mxu0 0.0
  %167 = vmatpush1.msra.mxu0 0.0
  %168 = vmatprep.subr.mxu0 0.0
  %169 = vmatpush1.msra.mxu0 0.0
  %170 = vmatprep.subr.mxu0 0.0
  %171 = vmatpush1.msra.mxu0 0.0
  %172 = vmatprep.subr.mxu0 0.0
  %173 = vmatpush1.msra.mxu0 0.0
  %174 = vmatprep.subr.mxu0 0.0
  %175 = vmatpush1.msra.mxu0 0.0
  %176 = vmatprep.subr.mxu0 0.0
  %177 = vmatpush1.msra.mxu0 0.0
  %178 = vmatprep.subr.mxu0 0.0
  %179 = vmatpush1.msra.mxu0 0.0
  %180 = vmatprep.subr.mxu0 0.0
  %181 = vmatpush1.msra.mxu0 0.0
  %182 = vmatprep.subr.mxu0 0.0
  %183 = vmatpush1.msra.mxu0 0.0
  %184 = vmatprep.subr.mxu0 0.0
  %185 = vmatpush1.msra.mxu0 0.0
  %186 = vmatprep.subr.mxu0 0.0
  %187 = vmatpush1.msra.mxu0 0.0
  %188 = vmatprep.subr.mxu0 0.0
  %189 = vmatpush1.msra.mxu0 0.0
  %190 = vmatprep.subr.mxu0 0.0
  %191 = vmatpush1.msra.mxu0 0.0
  %192 = vmatprep.subr.mxu0 0.0
  %193 = vmatpush1.msra.mxu0 0.0
  %194 = vmatprep.subr.mxu0 0.0
  %195 = vmatpush1.msra.mxu0 0.0
  %196 = vmatprep.subr.mxu0 0.0
  %197 = vmatpush1.msra.mxu0 0.0
  %198 = vmatprep.subr.mxu0 0.0
  %199 = vmatpush1.msra.mxu0 0.0
  %200 = vmatprep.subr.mxu0 0.0
  %201 = vmatpush1.msra.mxu0 0.0
  %202 = vmatprep.subr.mxu0 0.0
  %203 = vmatpush1.msra.mxu0 0.0
  %204 = vmatprep.mubr.f32.mxu0 0.0
  %205 = vmatmul.mubr.f32.gmra.mrb[0].mxu0 %v138
  %v206 = vpop.f32.mrb[0].mxu0
  %v207 = vadd.f32 0.0, %v206
  %v208 = vpop.f32.mrb[0].mxu0
  %209 = vdwg.mxu0
  %v210 = vadd.f32 %v134, %v207
  %v211 = vtanh.pop %v210
  %v212 = vmul.f32 %v211, %v28
  %v213 = vadd.f32 %v212, %v29
  %v214 = vmul.f32 %v213, %v125
  %216 = vrot.lane.b32.xlu0 %v213, 64
  %v217 = vpop.permute.xlu0 %216
  %v219 = vmul.f32 %v213, %v217
  %221 = vrot.lane.b32.xlu0 %v219, 32
  %v222 = vpop.permute.xlu0 %221
  %v224 = vadd.f32 %v214, %v222
  %v225 = vtanh.pop %v224
  %227 = vrot.lane.b32.xlu0 %v225, 64
  %v228 = vpop.permute.xlu0 %227
  %v230 = vmul.f32 %v213, %v228
  %v231 = vadd.f32 %v132, %v230
  %s232 = scalar_lea.vmem %s0, 16
  %v233 = vld [vmem:[%s232] sm:$0xff]
  %235 = vrot.lane.b32.xlu0 %v230, 32
  %v236 = vpop.permute.xlu0 %235
  %v237 = vsel %vm33, %v236, 0
  %239 = vmatprep.subr.mxu0 0.0
  %240 = vmatpush1.msra.mxu0 %v19
  %241 = vmatprep.subr.mxu0 0.0
  %242 = vmatpush1.msra.mxu0 %v20
  %243 = vmatprep.subr.mxu0 0.0
  %244 = vmatpush1.msra.mxu0 %v21
  %245 = vmatprep.subr.mxu0 0.0
  %246 = vmatpush1.msra.mxu0 %v22
  %247 = vmatprep.subr.mxu0 0.0
  %248 = vmatpush1.msra.mxu0 0.0
  %249 = vmatprep.subr.mxu0 0.0
  %250 = vmatpush1.msra.mxu0 0.0
  %251 = vmatprep.subr.mxu0 0.0
  %252 = vmatpush1.msra.mxu0 0.0
  %253 = vmatprep.subr.mxu0 0.0
  %254 = vmatpush1.msra.mxu0 0.0
  %255 = vmatprep.subr.mxu0 0.0
  %256 = vmatpush1.msra.mxu0 0.0
  %257 = vmatprep.subr.mxu0 0.0
  %258 = vmatpush1.msra.mxu0 0.0
  %259 = vmatprep.subr.mxu0 0.0
  %260 = vmatpush1.msra.mxu0 0.0
  %261 = vmatprep.subr.mxu0 0.0
  %262 = vmatpush1.msra.mxu0 0.0
  %263 = vmatprep.subr.mxu0 0.0
  %264 = vmatpush1.msra.mxu0 0.0
  %265 = vmatprep.subr.mxu0 0.0
  %266 = vmatpush1.msra.mxu0 0.0
  %267 = vmatprep.subr.mxu0 0.0
  %268 = vmatpush1.msra.mxu0 0.0
  %269 = vmatprep.subr.mxu0 0.0
  %270 = vmatpush1.msra.mxu0 0.0
  %271 = vmatprep.subr.mxu0 0.0
  %272 = vmatpush1.msra.mxu0 0.0
  %273 = vmatprep.subr.mxu0 0.0
  %274 = vmatpush1.msra.mxu0 0.0
  %275 = vmatprep.subr.mxu0 0.0
  %276 = vmatpush1.msra.mxu0 0.0
  %277 = vmatprep.subr.mxu0 0.0
  %278 = vmatpush1.msra.mxu0 0.0
  %279 = vmatprep.subr.mxu0 0.0
  %280 = vmatpush1.msra.mxu0 0.0
  %281 = vmatprep.subr.mxu0 0.0
  %282 = vmatpush1.msra.mxu0 0.0
  %283 = vmatprep.subr.mxu0 0.0
  %284 = vmatpush1.msra.mxu0 0.0
  %285 = vmatprep.subr.mxu0 0.0
  %286 = vmatpush1.msra.mxu0 0.0
  %287 = vmatprep.subr.mxu0 0.0
  %288 = vmatpush1.msra.mxu0 0.0
  %289 = vmatprep.subr.mxu0 0.0
  %290 = vmatpush1.msra.mxu0 0.0
  %291 = vmatprep.subr.mxu0 0.0
  %292 = vmatpush1.msra.mxu0 0.0
  %293 = vmatprep.subr.mxu0 0.0
  %294 = vmatpush1.msra.mxu0 0.0
  %295 = vmatprep.subr.mxu0 0.0
  %296 = vmatpush1.msra.mxu0 0.0
  %297 = vmatprep.subr.mxu0 0.0
  %298 = vmatpush1.msra.mxu0 0.0
  %299 = vmatprep.subr.mxu0 0.0
  %300 = vmatpush1.msra.mxu0 0.0
  %301 = vmatprep.subr.mxu0 0.0
  %302 = vmatpush1.msra.mxu0 0.0
  %303 = vmatprep.mubr.f32.mxu0 0.0
  %304 = vmatmul.mubr.f32.gmra.mrb[0].mxu0 %v237
  %v305 = vpop.f32.mrb[0].mxu0
  %v306 = vadd.f32 0.0, %v305
  %v307 = vpop.f32.mrb[0].mxu0
  %308 = vdwg.mxu0
  %v309 = vadd.f32 %v233, %v306
  %v310 = vtanh.pop %v309
  %v311 = vmul.f32 %v310, %v28
  %v312 = vadd.f32 %v311, %v29
  %v313 = vmul.f32 %v312, %v224
  %315 = vrot.lane.b32.xlu0 %v312, 64
  %v316 = vpop.permute.xlu0 %315
  %v318 = vmul.f32 %v312, %v316
  %320 = vrot.lane.b32.xlu0 %v318, 32
  %v321 = vpop.permute.xlu0 %320
  %v323 = vadd.f32 %v313, %v321
  %v324 = vtanh.pop %v323
  %326 = vrot.lane.b32.xlu0 %v324, 64
  %v327 = vpop.permute.xlu0 %326
  %v329 = vmul.f32 %v312, %v327
  %v330 = vadd.f32 %v231, %v329
  %s331 = scalar_lea.vmem %s0, 24
  %v332 = vld [vmem:[%s331] sm:$0xff]
  %334 = vrot.lane.b32.xlu0 %v329, 32
  %v335 = vpop.permute.xlu0 %334
  %v336 = vsel %vm33, %v335, 0
  %338 = vmatprep.subr.mxu0 0.0
  %339 = vmatpush1.msra.mxu0 %v19
  %340 = vmatprep.subr.mxu0 0.0
  %341 = vmatpush1.msra.mxu0 %v20
  %342 = vmatprep.subr.mxu0 0.0
  %343 = vmatpush1.msra.mxu0 %v21
  %344 = vmatprep.subr.mxu0 0.0
  %345 = vmatpush1.msra.mxu0 %v22
  %346 = vmatprep.subr.mxu0 0.0
  %347 = vmatpush1.msra.mxu0 0.0
  %348 = vmatprep.subr.mxu0 0.0
  %349 = vmatpush1.msra.mxu0 0.0
  %350 = vmatprep.subr.mxu0 0.0
  %351 = vmatpush1.msra.mxu0 0.0
  %352 = vmatprep.subr.mxu0 0.0
  %353 = vmatpush1.msra.mxu0 0.0
  %354 = vmatprep.subr.mxu0 0.0
  %355 = vmatpush1.msra.mxu0 0.0
  %356 = vmatprep.subr.mxu0 0.0
  %357 = vmatpush1.msra.mxu0 0.0
  %358 = vmatprep.subr.mxu0 0.0
  %359 = vmatpush1.msra.mxu0 0.0
  %360 = vmatprep.subr.mxu0 0.0
  %361 = vmatpush1.msra.mxu0 0.0
  %362 = vmatprep.subr.mxu0 0.0
  %363 = vmatpush1.msra.mxu0 0.0
  %364 = vmatprep.subr.mxu0 0.0
  %365 = vmatpush1.msra.mxu0 0.0
  %366 = vmatprep.subr.mxu0 0.0
  %367 = vmatpush1.msra.mxu0 0.0
  %368 = vmatprep.subr.mxu0 0.0
  %369 = vmatpush1.msra.mxu0 0.0
  %370 = vmatprep.subr.mxu0 0.0
  %371 = vmatpush1.msra.mxu0 0.0
  %372 = vmatprep.subr.mxu0 0.0
  %373 = vmatpush1.msra.mxu0 0.0
  %374 = vmatprep.subr.mxu0 0.0
  %375 = vmatpush1.msra.mxu0 0.0
  %376 = vmatprep.subr.mxu0 0.0
  %377 = vmatpush1.msra.mxu0 0.0
  %378 = vmatprep.subr.mxu0 0.0
  %379 = vmatpush1.msra.mxu0 0.0
  %380 = vmatprep.subr.mxu0 0.0
  %381 = vmatpush1.msra.mxu0 0.0
  %382 = vmatprep.subr.mxu0 0.0
  %383 = vmatpush1.msra.mxu0 0.0
  %384 = vmatprep.subr.mxu0 0.0
  %385 = vmatpush1.msra.mxu0 0.0
  %386 = vmatprep.subr.mxu0 0.0
  %387 = vmatpush1.msra.mxu0 0.0
  %388 = vmatprep.subr.mxu0 0.0
  %389 = vmatpush1.msra.mxu0 0.0
  %390 = vmatprep.subr.mxu0 0.0
  %391 = vmatpush1.msra.mxu0 0.0
  %392 = vmatprep.subr.mxu0 0.0
  %393 = vmatpush1.msra.mxu0 0.0
  %394 = vmatprep.subr.mxu0 0.0
  %395 = vmatpush1.msra.mxu0 0.0
  %396 = vmatprep.subr.mxu0 0.0
  %397 = vmatpush1.msra.mxu0 0.0
  %398 = vmatprep.subr.mxu0 0.0
  %399 = vmatpush1.msra.mxu0 0.0
  %400 = vmatprep.subr.mxu0 0.0
  %401 = vmatpush1.msra.mxu0 0.0
  %402 = vmatprep.mubr.f32.mxu0 0.0
  %403 = vmatmul.mubr.f32.gmra.mrb[0].mxu0 %v336
  %v404 = vpop.f32.mrb[0].mxu0
  %v405 = vadd.f32 0.0, %v404
  %v406 = vpop.f32.mrb[0].mxu0
  %407 = vdwg.mxu0
  %v408 = vadd.f32 %v332, %v405
  %v409 = vtanh.pop %v408
  %v410 = vmul.f32 %v409, %v28
  %v411 = vadd.f32 %v410, %v29
  %v412 = vmul.f32 %v411, %v323
  %414 = vrot.lane.b32.xlu0 %v411, 64
  %v415 = vpop.permute.xlu0 %414
  %v417 = vmul.f32 %v411, %v415
  %419 = vrot.lane.b32.xlu0 %v417, 32
  %v420 = vpop.permute.xlu0 %419
  %v422 = vadd.f32 %v412, %v420
  %v423 = vtanh.pop %v422
  %425 = vrot.lane.b32.xlu0 %v423, 64
  %v426 = vpop.permute.xlu0 %425
  %v428 = vmul.f32 %v411, %v426
  %v429 = vadd.f32 %v330, %v428
  %s430 = scalar_lea.vmem %s0, 32
  %v431 = vld [vmem:[%s430] sm:$0xff]
  %433 = vrot.lane.b32.xlu0 %v428, 32
  %v434 = vpop.permute.xlu0 %433
  %v435 = vsel %vm33, %v434, 0
  %437 = vmatprep.subr.mxu0 0.0
  %438 = vmatpush1.msra.mxu0 %v19
  %439 = vmatprep.subr.mxu0 0.0
  %440 = vmatpush1.msra.mxu0 %v20
  %441 = vmatprep.subr.mxu0 0.0
  %442 = vmatpush1.msra.mxu0 %v21
  %443 = vmatprep.subr.mxu0 0.0
  %444 = vmatpush1.msra.mxu0 %v22
  %445 = vmatprep.subr.mxu0 0.0
  %446 = vmatpush1.msra.mxu0 0.0
  %447 = vmatprep.subr.mxu0 0.0
  %448 = vmatpush1.msra.mxu0 0.0
  %449 = vmatprep.subr.mxu0 0.0
  %450 = vmatpush1.msra.mxu0 0.0
  %451 = vmatprep.subr.mxu0 0.0
  %452 = vmatpush1.msra.mxu0 0.0
  %453 = vmatprep.subr.mxu0 0.0
  %454 = vmatpush1.msra.mxu0 0.0
  %455 = vmatprep.subr.mxu0 0.0
  %456 = vmatpush1.msra.mxu0 0.0
  %457 = vmatprep.subr.mxu0 0.0
  %458 = vmatpush1.msra.mxu0 0.0
  %459 = vmatprep.subr.mxu0 0.0
  %460 = vmatpush1.msra.mxu0 0.0
  %461 = vmatprep.subr.mxu0 0.0
  %462 = vmatpush1.msra.mxu0 0.0
  %463 = vmatprep.subr.mxu0 0.0
  %464 = vmatpush1.msra.mxu0 0.0
  %465 = vmatprep.subr.mxu0 0.0
  %466 = vmatpush1.msra.mxu0 0.0
  %467 = vmatprep.subr.mxu0 0.0
  %468 = vmatpush1.msra.mxu0 0.0
  %469 = vmatprep.subr.mxu0 0.0
  %470 = vmatpush1.msra.mxu0 0.0
  %471 = vmatprep.subr.mxu0 0.0
  %472 = vmatpush1.msra.mxu0 0.0
  %473 = vmatprep.subr.mxu0 0.0
  %474 = vmatpush1.msra.mxu0 0.0
  %475 = vmatprep.subr.mxu0 0.0
  %476 = vmatpush1.msra.mxu0 0.0
  %477 = vmatprep.subr.mxu0 0.0
  %478 = vmatpush1.msra.mxu0 0.0
  %479 = vmatprep.subr.mxu0 0.0
  %480 = vmatpush1.msra.mxu0 0.0
  %481 = vmatprep.subr.mxu0 0.0
  %482 = vmatpush1.msra.mxu0 0.0
  %483 = vmatprep.subr.mxu0 0.0
  %484 = vmatpush1.msra.mxu0 0.0
  %485 = vmatprep.subr.mxu0 0.0
  %486 = vmatpush1.msra.mxu0 0.0
  %487 = vmatprep.subr.mxu0 0.0
  %488 = vmatpush1.msra.mxu0 0.0
  %489 = vmatprep.subr.mxu0 0.0
  %490 = vmatpush1.msra.mxu0 0.0
  %491 = vmatprep.subr.mxu0 0.0
  %492 = vmatpush1.msra.mxu0 0.0
  %493 = vmatprep.subr.mxu0 0.0
  %494 = vmatpush1.msra.mxu0 0.0
  %495 = vmatprep.subr.mxu0 0.0
  %496 = vmatpush1.msra.mxu0 0.0
  %497 = vmatprep.subr.mxu0 0.0
  %498 = vmatpush1.msra.mxu0 0.0
  %499 = vmatprep.subr.mxu0 0.0
  %500 = vmatpush1.msra.mxu0 0.0
  %501 = vmatprep.mubr.f32.mxu0 0.0
  %502 = vmatmul.mubr.f32.gmra.mrb[0].mxu0 %v435
  %v503 = vpop.f32.mrb[0].mxu0
  %v504 = vadd.f32 0.0, %v503
  %v505 = vpop.f32.mrb[0].mxu0
  %506 = vdwg.mxu0
  %v507 = vadd.f32 %v431, %v504
  %v508 = vtanh.pop %v507
  %v509 = vmul.f32 %v508, %v28
  %v510 = vadd.f32 %v509, %v29
  %v511 = vmul.f32 %v510, %v422
  %513 = vrot.lane.b32.xlu0 %v510, 64
  %v514 = vpop.permute.xlu0 %513
  %v516 = vmul.f32 %v510, %v514
  %518 = vrot.lane.b32.xlu0 %v516, 32
  %v519 = vpop.permute.xlu0 %518
  %v521 = vadd.f32 %v511, %v519
  %v522 = vtanh.pop %v521
  %524 = vrot.lane.b32.xlu0 %v522, 64
  %v525 = vpop.permute.xlu0 %524
  %v527 = vmul.f32 %v510, %v525
  %v528 = vadd.f32 %v429, %v527
  %s529 = scalar_lea.vmem %s0, 40
  %v530 = vld [vmem:[%s529] sm:$0xff]
  %532 = vrot.lane.b32.xlu0 %v527, 32
  %v533 = vpop.permute.xlu0 %532
  %v534 = vsel %vm33, %v533, 0
  %536 = vmatprep.subr.mxu0 0.0
  %537 = vmatpush1.msra.mxu0 %v19
  %538 = vmatprep.subr.mxu0 0.0
  %539 = vmatpush1.msra.mxu0 %v20
  %540 = vmatprep.subr.mxu0 0.0
  %541 = vmatpush1.msra.mxu0 %v21
  %542 = vmatprep.subr.mxu0 0.0
  %543 = vmatpush1.msra.mxu0 %v22
  %544 = vmatprep.subr.mxu0 0.0
  %545 = vmatpush1.msra.mxu0 0.0
  %546 = vmatprep.subr.mxu0 0.0
  %547 = vmatpush1.msra.mxu0 0.0
  %548 = vmatprep.subr.mxu0 0.0
  %549 = vmatpush1.msra.mxu0 0.0
  %550 = vmatprep.subr.mxu0 0.0
  %551 = vmatpush1.msra.mxu0 0.0
  %552 = vmatprep.subr.mxu0 0.0
  %553 = vmatpush1.msra.mxu0 0.0
  %554 = vmatprep.subr.mxu0 0.0
  %555 = vmatpush1.msra.mxu0 0.0
  %556 = vmatprep.subr.mxu0 0.0
  %557 = vmatpush1.msra.mxu0 0.0
  %558 = vmatprep.subr.mxu0 0.0
  %559 = vmatpush1.msra.mxu0 0.0
  %560 = vmatprep.subr.mxu0 0.0
  %561 = vmatpush1.msra.mxu0 0.0
  %562 = vmatprep.subr.mxu0 0.0
  %563 = vmatpush1.msra.mxu0 0.0
  %564 = vmatprep.subr.mxu0 0.0
  %565 = vmatpush1.msra.mxu0 0.0
  %566 = vmatprep.subr.mxu0 0.0
  %567 = vmatpush1.msra.mxu0 0.0
  %568 = vmatprep.subr.mxu0 0.0
  %569 = vmatpush1.msra.mxu0 0.0
  %570 = vmatprep.subr.mxu0 0.0
  %571 = vmatpush1.msra.mxu0 0.0
  %572 = vmatprep.subr.mxu0 0.0
  %573 = vmatpush1.msra.mxu0 0.0
  %574 = vmatprep.subr.mxu0 0.0
  %575 = vmatpush1.msra.mxu0 0.0
  %576 = vmatprep.subr.mxu0 0.0
  %577 = vmatpush1.msra.mxu0 0.0
  %578 = vmatprep.subr.mxu0 0.0
  %579 = vmatpush1.msra.mxu0 0.0
  %580 = vmatprep.subr.mxu0 0.0
  %581 = vmatpush1.msra.mxu0 0.0
  %582 = vmatprep.subr.mxu0 0.0
  %583 = vmatpush1.msra.mxu0 0.0
  %584 = vmatprep.subr.mxu0 0.0
  %585 = vmatpush1.msra.mxu0 0.0
  %586 = vmatprep.subr.mxu0 0.0
  %587 = vmatpush1.msra.mxu0 0.0
  %588 = vmatprep.subr.mxu0 0.0
  %589 = vmatpush1.msra.mxu0 0.0
  %590 = vmatprep.subr.mxu0 0.0
  %591 = vmatpush1.msra.mxu0 0.0
  %592 = vmatprep.subr.mxu0 0.0
  %593 = vmatpush1.msra.mxu0 0.0
  %594 = vmatprep.subr.mxu0 0.0
  %595 = vmatpush1.msra.mxu0 0.0
  %596 = vmatprep.subr.mxu0 0.0
  %597 = vmatpush1.msra.mxu0 0.0
  %598 = vmatprep.subr.mxu0 0.0
  %599 = vmatpush1.msra.mxu0 0.0
  %600 = vmatprep.mubr.f32.mxu0 0.0
  %601 = vmatmul.mubr.f32.gmra.mrb[0].mxu0 %v534
  %v602 = vpop.f32.mrb[0].mxu0
  %v603 = vadd.f32 0.0, %v602
  %v604 = vpop.f32.mrb[0].mxu0
  %605 = vdwg.mxu0
  %v606 = vadd.f32 %v530, %v603
  %v607 = vtanh.pop %v606
  %v608 = vmul.f32 %v607, %v28
  %v609 = vadd.f32 %v608, %v29
  %v610 = vmul.f32 %v609, %v521
  %612 = vrot.lane.b32.xlu0 %v609, 64
  %v613 = vpop.permute.xlu0 %612
  %v615 = vmul.f32 %v609, %v613
  %617 = vrot.lane.b32.xlu0 %v615, 32
  %v618 = vpop.permute.xlu0 %617
  %v620 = vadd.f32 %v610, %v618
  %v621 = vtanh.pop %v620
  %623 = vrot.lane.b32.xlu0 %v621, 64
  %v624 = vpop.permute.xlu0 %623
  %v626 = vmul.f32 %v609, %v624
  %v627 = vadd.f32 %v528, %v626
  %s628 = scalar_lea.vmem %s0, 48
  %v629 = vld [vmem:[%s628] sm:$0xff]
  %631 = vrot.lane.b32.xlu0 %v626, 32
  %v632 = vpop.permute.xlu0 %631
  %v633 = vsel %vm33, %v632, 0
  %635 = vmatprep.subr.mxu0 0.0
  %636 = vmatpush1.msra.mxu0 %v19
  %637 = vmatprep.subr.mxu0 0.0
  %638 = vmatpush1.msra.mxu0 %v20
  %639 = vmatprep.subr.mxu0 0.0
  %640 = vmatpush1.msra.mxu0 %v21
  %641 = vmatprep.subr.mxu0 0.0
  %642 = vmatpush1.msra.mxu0 %v22
  %643 = vmatprep.subr.mxu0 0.0
  %644 = vmatpush1.msra.mxu0 0.0
  %645 = vmatprep.subr.mxu0 0.0
  %646 = vmatpush1.msra.mxu0 0.0
  %647 = vmatprep.subr.mxu0 0.0
  %648 = vmatpush1.msra.mxu0 0.0
  %649 = vmatprep.subr.mxu0 0.0
  %650 = vmatpush1.msra.mxu0 0.0
  %651 = vmatprep.subr.mxu0 0.0
  %652 = vmatpush1.msra.mxu0 0.0
  %653 = vmatprep.subr.mxu0 0.0
  %654 = vmatpush1.msra.mxu0 0.0
  %655 = vmatprep.subr.mxu0 0.0
  %656 = vmatpush1.msra.mxu0 0.0
  %657 = vmatprep.subr.mxu0 0.0
  %658 = vmatpush1.msra.mxu0 0.0
  %659 = vmatprep.subr.mxu0 0.0
  %660 = vmatpush1.msra.mxu0 0.0
  %661 = vmatprep.subr.mxu0 0.0
  %662 = vmatpush1.msra.mxu0 0.0
  %663 = vmatprep.subr.mxu0 0.0
  %664 = vmatpush1.msra.mxu0 0.0
  %665 = vmatprep.subr.mxu0 0.0
  %666 = vmatpush1.msra.mxu0 0.0
  %667 = vmatprep.subr.mxu0 0.0
  %668 = vmatpush1.msra.mxu0 0.0
  %669 = vmatprep.subr.mxu0 0.0
  %670 = vmatpush1.msra.mxu0 0.0
  %671 = vmatprep.subr.mxu0 0.0
  %672 = vmatpush1.msra.mxu0 0.0
  %673 = vmatprep.subr.mxu0 0.0
  %674 = vmatpush1.msra.mxu0 0.0
  %675 = vmatprep.subr.mxu0 0.0
  %676 = vmatpush1.msra.mxu0 0.0
  %677 = vmatprep.subr.mxu0 0.0
  %678 = vmatpush1.msra.mxu0 0.0
  %679 = vmatprep.subr.mxu0 0.0
  %680 = vmatpush1.msra.mxu0 0.0
  %681 = vmatprep.subr.mxu0 0.0
  %682 = vmatpush1.msra.mxu0 0.0
  %683 = vmatprep.subr.mxu0 0.0
  %684 = vmatpush1.msra.mxu0 0.0
  %685 = vmatprep.subr.mxu0 0.0
  %686 = vmatpush1.msra.mxu0 0.0
  %687 = vmatprep.subr.mxu0 0.0
  %688 = vmatpush1.msra.mxu0 0.0
  %689 = vmatprep.subr.mxu0 0.0
  %690 = vmatpush1.msra.mxu0 0.0
  %691 = vmatprep.subr.mxu0 0.0
  %692 = vmatpush1.msra.mxu0 0.0
  %693 = vmatprep.subr.mxu0 0.0
  %694 = vmatpush1.msra.mxu0 0.0
  %695 = vmatprep.subr.mxu0 0.0
  %696 = vmatpush1.msra.mxu0 0.0
  %697 = vmatprep.subr.mxu0 0.0
  %698 = vmatpush1.msra.mxu0 0.0
  %699 = vmatprep.mubr.f32.mxu0 0.0
  %700 = vmatmul.mubr.f32.gmra.mrb[0].mxu0 %v633
  %v701 = vpop.f32.mrb[0].mxu0
  %v702 = vadd.f32 0.0, %v701
  %v703 = vpop.f32.mrb[0].mxu0
  %704 = vdwg.mxu0
  %v705 = vadd.f32 %v629, %v702
  %v706 = vtanh.pop %v705
  %v707 = vmul.f32 %v706, %v28
  %v708 = vadd.f32 %v707, %v29
  %v709 = vmul.f32 %v708, %v620
  %711 = vrot.lane.b32.xlu0 %v708, 64
  %v712 = vpop.permute.xlu0 %711
  %v714 = vmul.f32 %v708, %v712
  %716 = vrot.lane.b32.xlu0 %v714, 32
  %v717 = vpop.permute.xlu0 %716
  %v719 = vadd.f32 %v709, %v717
  %v720 = vtanh.pop %v719
  %722 = vrot.lane.b32.xlu0 %v720, 64
  %v723 = vpop.permute.xlu0 %722
  %v725 = vmul.f32 %v708, %v723
  %v726 = vadd.f32 %v627, %v725
  %s727 = scalar_lea.vmem %s0, 56
  %v728 = vld [vmem:[%s727] sm:$0xff]
  %730 = vrot.lane.b32.xlu0 %v725, 32
  %v731 = vpop.permute.xlu0 %730
  %v732 = vsel %vm33, %v731, 0
  %734 = vmatprep.subr.mxu0 0.0
  %735 = vmatpush1.msra.mxu0 %v19
  %736 = vmatprep.subr.mxu0 0.0
  %737 = vmatpush1.msra.mxu0 %v20
  %738 = vmatprep.subr.mxu0 0.0
  %739 = vmatpush1.msra.mxu0 %v21
  %740 = vmatprep.subr.mxu0 0.0
  %741 = vmatpush1.msra.mxu0 %v22
  %742 = vmatprep.subr.mxu0 0.0
  %743 = vmatpush1.msra.mxu0 0.0
  %744 = vmatprep.subr.mxu0 0.0
  %745 = vmatpush1.msra.mxu0 0.0
  %746 = vmatprep.subr.mxu0 0.0
  %747 = vmatpush1.msra.mxu0 0.0
  %748 = vmatprep.subr.mxu0 0.0
  %749 = vmatpush1.msra.mxu0 0.0
  %750 = vmatprep.subr.mxu0 0.0
  %751 = vmatpush1.msra.mxu0 0.0
  %752 = vmatprep.subr.mxu0 0.0
  %753 = vmatpush1.msra.mxu0 0.0
  %754 = vmatprep.subr.mxu0 0.0
  %755 = vmatpush1.msra.mxu0 0.0
  %756 = vmatprep.subr.mxu0 0.0
  %757 = vmatpush1.msra.mxu0 0.0
  %758 = vmatprep.subr.mxu0 0.0
  %759 = vmatpush1.msra.mxu0 0.0
  %760 = vmatprep.subr.mxu0 0.0
  %761 = vmatpush1.msra.mxu0 0.0
  %762 = vmatprep.subr.mxu0 0.0
  %763 = vmatpush1.msra.mxu0 0.0
  %764 = vmatprep.subr.mxu0 0.0
  %765 = vmatpush1.msra.mxu0 0.0
  %766 = vmatprep.subr.mxu0 0.0
  %767 = vmatpush1.msra.mxu0 0.0
  %768 = vmatprep.subr.mxu0 0.0
  %769 = vmatpush1.msra.mxu0 0.0
  %770 = vmatprep.subr.mxu0 0.0
  %771 = vmatpush1.msra.mxu0 0.0
  %772 = vmatprep.subr.mxu0 0.0
  %773 = vmatpush1.msra.mxu0 0.0
  %774 = vmatprep.subr.mxu0 0.0
  %775 = vmatpush1.msra.mxu0 0.0
  %776 = vmatprep.subr.mxu0 0.0
  %777 = vmatpush1.msra.mxu0 0.0
  %778 = vmatprep.subr.mxu0 0.0
  %779 = vmatpush1.msra.mxu0 0.0
  %780 = vmatprep.subr.mxu0 0.0
  %781 = vmatpush1.msra.mxu0 0.0
  %782 = vmatprep.subr.mxu0 0.0
  %783 = vmatpush1.msra.mxu0 0.0
  %784 = vmatprep.subr.mxu0 0.0
  %785 = vmatpush1.msra.mxu0 0.0
  %786 = vmatprep.subr.mxu0 0.0
  %787 = vmatpush1.msra.mxu0 0.0
  %788 = vmatprep.subr.mxu0 0.0
  %789 = vmatpush1.msra.mxu0 0.0
  %790 = vmatprep.subr.mxu0 0.0
  %791 = vmatpush1.msra.mxu0 0.0
  %792 = vmatprep.subr.mxu0 0.0
  %793 = vmatpush1.msra.mxu0 0.0
  %794 = vmatprep.subr.mxu0 0.0
  %795 = vmatpush1.msra.mxu0 0.0
  %796 = vmatprep.subr.mxu0 0.0
  %797 = vmatpush1.msra.mxu0 0.0
  %798 = vmatprep.mubr.f32.mxu0 0.0
  %799 = vmatmul.mubr.f32.gmra.mrb[0].mxu0 %v732
  %v800 = vpop.f32.mrb[0].mxu0
  %v801 = vadd.f32 0.0, %v800
  %v802 = vpop.f32.mrb[0].mxu0
  %803 = vdwg.mxu0
  %v804 = vadd.f32 %v728, %v801
  %v805 = vtanh.pop %v804
  %v806 = vmul.f32 %v805, %v28
  %v807 = vadd.f32 %v806, %v29
  %v808 = vmul.f32 %v807, %v719
  %810 = vrot.lane.b32.xlu0 %v807, 64
  %v811 = vpop.permute.xlu0 %810
  %v813 = vmul.f32 %v807, %v811
  %815 = vrot.lane.b32.xlu0 %v813, 32
  %v816 = vpop.permute.xlu0 %815
  %v818 = vadd.f32 %v808, %v816
  %v819 = vtanh.pop %v818
  %821 = vrot.lane.b32.xlu0 %v819, 64
  %v822 = vpop.permute.xlu0 %821
  %v824 = vmul.f32 %v807, %v822
  %v825 = vadd.f32 %v726, %v824
  %827 = vrot.lane.b32.xlu0 %v824, 32
  %v828 = vpop.permute.xlu0 %827
  %830 = vst.msk [vmem:[#allocation2] sm:$0xff] %vm33, %v828
  %832 = vrot.lane.b32.xlu0 %v818, 96
  %v833 = vpop.permute.xlu0 %832
  %835 = vst.msk [vmem:[#allocation3] sm:$0xff] %vm33, %v833
  %v836 = vld [vmem:[%s2] sm:$0xff]
  %838 = vrot.lane.b32.xlu0 %v825, 32
  %v839 = vpop.permute.xlu0 %838
  %v841 = vadd.f32 %v836, %v839
  %842 = vst.msk [vmem:[%s2] sm:$0xff] %vm33, %v841
  // Predicated region
  $region14: #{lstm_mean_step.1} parent=0 // pred_check
    %p843 = pneg %p11
  $region15: #{lstm_mean_step.1} parent=0 // pred_check_branch
    %845 = sbr.rel (%p843) target = $region17
  $region16: #{lstm_mean_step.1} parent=0 // pred_region
    %v846 = vld [vmem:[%s2] sm:$0xff]
    %v847 = vmul.f32 %v846, 0.125
    %848 = vst.msk [vmem:[%s2] sm:$0xff] %vm33, %v847
  $region17: #{lstm_mean_step.1} parent=0 // pred_fallthru
    _
  // Predicated region
  $region18: #{lstm_mean_step.1} parent=0 // pred_check
    _
  $region19: #{lstm_mean_step.1} parent=0 // pred_check_branch
    %850 = sbr.rel (0) target = $region21
  $region20: #{lstm_mean_step.1} parent=0 // pred_region
    _
  $region21: #{lstm_mean_step.1} parent=0 // pred_fallthru
    _
  // Predicated region
  $region22: #{lstm_mean_step.1} parent=0 // pred_check
    _
  $region23: #{lstm_mean_step.1} parent=0 // pred_check_branch
    %852 = sbr.rel (0) target = $region25
  $region24: #{lstm_mean_step.1} parent=0 // pred_region
    _
  $region25: #{lstm_mean_step.1} parent=0 // pred_fallthru
    _

</llo_original>
